<compile_context>
chip_gen: v7x
topology: tpu7x:2x2x1
jax: 0.10.0
libtpu: 0.0.40
codegen_flags: <defaults>
</compile_context>

<pallas_src>
import functools

import jax
import jax.numpy as jnp
from jax.experimental import pallas as pl
from jax.experimental.pallas import tpu as pltpu


def _cbm_contrastive_kernel(tile,                   # static row-tile size (closure)
                            scalars_ref,            # SMEM prefetch: [batch_size, valid_count]
                            xall_ref,               # (N, D) bf16 normalized embeddings (resident)
                            lrow_ref,               # (N, 1) int32 labels, row view   (resident)
                            lcol_ref,               # (1, N) int32 labels, col view   (resident)
                            cid_ref,                # (1, N) int32 column indices     (resident)
                            part_ref):              # (1, 4, N) f32 per-tile partial sums (output)
    i = pl.program_id(0)

    B = scalars_ref[0]          # batch size
    V = scalars_ref[1]          # number of valid rows in the combined matrix

    r0 = pl.multiple_of(i * tile, tile)
    x_r = xall_ref[pl.ds(r0, tile), :]              # (TI, D) bf16
    l_r = lrow_ref[pl.ds(r0, tile), :]              # (TI, 1) int32

    # Pairwise L2 distances for this row tile.  Rows are unit-norm, so
    # d^2 = 2 - 2 * a.b  (single MXU matmul, bf16 inputs, f32 accumulate).
    dots = jax.lax.dot_general(x_r, xall_ref[...], (((1,), (1,)), ((), ())),
                               preferred_element_type=jnp.float32)    # (TI, N)
    d = jnp.sqrt(jnp.maximum(2.0 - 2.0 * dots, 0.0))                  # (TI, N)

    # Masks reproducing get_all_pairs_indices + the cross-batch "keep" filter.
    # Row-side conditions stay (TI, 1); column-side data is a constant (1, N)
    # input -- no (TI, N) iotas are generated per step.
    row_ids = r0 + jax.lax.broadcasted_iota(jnp.int32, (tile, 1), 0)  # (TI, 1)
    col_ids = cid_ref[...]                                            # (1, N)

    lab_eq = l_r == lcol_ref[...]                                     # (TI, N)
    base = ((row_ids < V) & (col_ids < V)) & ((row_ids < B) | (col_ids < B))
    pos_mask = lab_eq & (row_ids != col_ids) & base                   # diag excluded
    neg_mask = jnp.logical_not(lab_eq) & base

    # ContrastiveLoss: pos_loss = relu(d - 0), neg_loss = relu(1 - d)
    pos_vals = jnp.where(pos_mask, d, 0.0)
    neg_vals = jnp.where(neg_mask, jnp.maximum(1.0 - d, 0.0), 0.0)

    # Lane-dense per-tile partials (sublane reduce only); the cross-lane
    # collapse + AvgNonZero division happen once, in JAX glue.
    part_ref[0, 0:1, :] = jnp.sum(pos_vals, axis=0, keepdims=True)
    part_ref[0, 1:2, :] = jnp.sum((pos_vals > 0.0).astype(jnp.float32),
                                  axis=0, keepdims=True)
    part_ref[0, 2:3, :] = jnp.sum(neg_vals, axis=0, keepdims=True)
    part_ref[0, 3:4, :] = jnp.sum((neg_vals > 0.0).astype(jnp.float32),
                                  axis=0, keepdims=True)


def cbm_pair_loss(combined_emb, combined_lab, batch_size, valid_count, *, tile=None):
    """Dense cross-batch-memory contrastive loss on the combined [batch; memory] matrix."""
    N, D = combined_emb.shape
    if tile is None:
        tile = 256 if N % 256 == 0 else 128
    assert N % 128 == 0 and N % tile == 0 and tile % 16 == 0

    # LpDistance default: normalize_embeddings=True (glue, elementwise).
    norms = jnp.sqrt(jnp.sum(combined_emb * combined_emb, axis=1, keepdims=True))
    xn = (combined_emb / jnp.maximum(norms, 1e-12)).astype(jnp.bfloat16)

    lab = combined_lab.astype(jnp.int32)
    lrow = lab[:, None]                                               # (N, 1)
    lcol = lab[None, :]                                               # (1, N)
    col_ids = jnp.arange(N, dtype=jnp.int32)[None, :]                 # (1, N)
    scalars = jnp.stack([jnp.asarray(batch_size, jnp.int32),
                         jnp.asarray(valid_count, jnp.int32)])

    n_tiles = N // tile
    partials = pl.pallas_call(
        functools.partial(_cbm_contrastive_kernel, tile),
        out_shape=jax.ShapeDtypeStruct((n_tiles, 4, N), jnp.float32),
        grid_spec=pltpu.PrefetchScalarGridSpec(
            num_scalar_prefetch=1,
            grid=(n_tiles,),
            in_specs=[
                pl.BlockSpec((N, D), lambda i, s: (0, 0)),   # resident normalized embeddings
                pl.BlockSpec((N, 1), lambda i, s: (0, 0)),   # resident labels (row view)
                pl.BlockSpec((1, N), lambda i, s: (0, 0)),   # resident labels (col view)
                pl.BlockSpec((1, N), lambda i, s: (0, 0)),   # resident column indices
            ],
            out_specs=pl.BlockSpec((1, 4, N), lambda i, s: (i, 0, 0)),
        ),
        compiler_params=pltpu.CompilerParams(dimension_semantics=("parallel",)),
    )(scalars, xn, lrow, lcol, col_ids)

    # AvgNonZeroReducer per sub-loss, then summed (MultipleReducers default).
    totals = jnp.sum(partials, axis=(0, 2))                           # (4,)
    ps, pc, ns, nc = totals[0], totals[1], totals[2], totals[3]
    pos_avg = jnp.where(pc > 0.0, ps / jnp.maximum(pc, 1.0), 0.0)
    neg_avg = jnp.where(nc > 0.0, ns / jnp.maximum(nc, 1.0), 0.0)
    return pos_avg + neg_avg


@functools.partial(jax.jit, static_argnames=("memory_size",))
def cross_batch_memory_forward(embeddings, labels, emb_mem, lab_mem,
                               queue_idx, has_been_filled, *, memory_size):
    """Functional equivalent of CrossBatchMemory.forward (default loss, no miner).

    Returns (loss, new_emb_mem, new_lab_mem, new_queue_idx, new_has_been_filled).
    """
    B = embeddings.shape[0]
    M = memory_size

    # Combined = [batch embeddings ; full memory]; rows past B + #valid-memory are
    # masked out inside the kernel (emulates the dynamic E_mem = memory[:queue_idx]).
    combined_emb = jnp.concatenate([embeddings, emb_mem], axis=0)
    combined_lab = jnp.concatenate([labels.astype(jnp.int32),
                                    lab_mem.astype(jnp.int32)], axis=0)
    valid_mem = jnp.where(has_been_filled, jnp.int32(M), queue_idx.astype(jnp.int32))
    loss = cbm_pair_loss(combined_emb, combined_lab, B, B + valid_mem)

    # add_to_memory: circular-buffer write (intended semantics of the torch code).
    positions = (queue_idx + jnp.arange(B, dtype=jnp.int32)) % M
    new_emb_mem = emb_mem.at[positions].set(embeddings)
    new_lab_mem = lab_mem.at[positions].set(labels.astype(lab_mem.dtype))
    new_queue_idx = (queue_idx + B) % M
    new_has_been_filled = jnp.logical_or(has_been_filled, new_queue_idx <= queue_idx)
    return loss, new_emb_mem, new_lab_mem, new_queue_idx, new_has_been_filled


if __name__ == "__main__":
    B, D, M = 8, 32, 120          # batch, embedding_size, memory_size  (B + M = 128)

    key = jax.random.PRNGKey(0)
    k1, k2, k3, k4 = jax.random.split(key, 4)
    embeddings = jax.random.normal(k1, (B, D), dtype=jnp.float32)
    labels = jax.random.randint(k2, (B,), 0, 4, dtype=jnp.int32)

    # Deterministic synthetic module state: pre-filled memory bank.
    emb_mem = jax.random.normal(k3, (M, D), dtype=jnp.float32)
    lab_mem = jax.random.randint(k4, (M,), 0, 4, dtype=jnp.int32)
    queue_idx = jnp.int32(0)
    has_been_filled = jnp.bool_(True)

    loss, new_emb_mem, new_lab_mem, new_q, new_filled = cross_batch_memory_forward(
        embeddings, labels, emb_mem, lab_mem, queue_idx, has_been_filled,
        memory_size=M)

    jax.block_until_ready(loss)
    jax.block_until_ready(new_emb_mem)
    jax.block_until_ready(new_lab_mem)
    print("KERNEL_OK")
</pallas_src>

<mosaic_0001>
module attributes {stable_mosaic.version = 11 : i64} {
  func.func @_cbm_contrastive_kernel(%arg0: i32, %arg1: memref<2xi32, #tpu.memory_space<smem>>, %arg2: memref<128x32xbf16, #tpu.memory_space<vmem>>, %arg3: memref<128x1xi32, #tpu.memory_space<vmem>>, %arg4: memref<1x128xi32, #tpu.memory_space<vmem>>, %arg5: memref<1x128xi32, #tpu.memory_space<vmem>>, %arg6: memref<1x4x128xf32, #tpu.memory_space<vmem>>) attributes {dimension_semantics = [#tpu.dimension_semantics<parallel>], iteration_bounds = array<i64: 1>, scalar_prefetch = 1 : i64, scratch_operands = 0 : i64, tpu.core_type = #tpu.core_type<tc>, window_params = [{pipeline_mode = #tpu.pipeline_mode<synchronous>, transform_indices = @transform_0, window_bounds = array<i64: 128, 32>}, {pipeline_mode = #tpu.pipeline_mode<synchronous>, transform_indices = @transform_1, window_bounds = array<i64: 128, 1>}, {pipeline_mode = #tpu.pipeline_mode<synchronous>, transform_indices = @transform_2, window_bounds = array<i64: 1, 128>}, {pipeline_mode = #tpu.pipeline_mode<synchronous>, transform_indices = @transform_3, window_bounds = array<i64: 1, 128>}, {transform_indices = @transform_4, window_bounds = array<i64: 1, 4, 128>}]} {
    %c0 = arith.constant 0 : index
    %0 = memref.load %arg1[%c0] : memref<2xi32, #tpu.memory_space<smem>>
    %c1 = arith.constant 1 : index
    %1 = memref.load %arg1[%c1] : memref<2xi32, #tpu.memory_space<smem>>
    %c128_i32 = arith.constant 128 : i32
    %2 = arith.muli %arg0, %c128_i32 : i32
    %3 = tpu.assume_multiple %2, 128 : i32
    %4 = arith.index_cast %3 : i32 to index
    %c0_0 = arith.constant 0 : index
    %5 = vector.load %arg2[%4, %c0_0] : memref<128x32xbf16, #tpu.memory_space<vmem>>, vector<128x32xbf16>
    %6 = arith.index_cast %3 : i32 to index
    %c0_1 = arith.constant 0 : index
    %7 = vector.load %arg3[%6, %c0_1] : memref<128x1xi32, #tpu.memory_space<vmem>>, vector<128x1xi32>
    %c0_2 = arith.constant 0 : index
    %c0_3 = arith.constant 0 : index
    %8 = vector.load %arg2[%c0_2, %c0_3] : memref<128x32xbf16, #tpu.memory_space<vmem>>, vector<128x32xbf16>
    %cst = arith.constant dense<0.000000e+00> : vector<128x128xf32>
    %9 = tpu.matmul %5, %8, %cst {dimension_numbers = #tpu.dot_dimension_numbers<[1], [1], [0], [0], [0, 0, 1, 0], [], []>} : vector<128x32xbf16>, vector<128x32xbf16>, vector<128x128xf32> -> vector<128x128xf32>
    %cst_4 = arith.constant 2.000000e+00 : f32
    %10 = vector.broadcast %cst_4 : f32 to vector<128x128xf32>
    %11 = arith.mulf %10, %9 : vector<128x128xf32>
    %cst_5 = arith.constant 2.000000e+00 : f32
    %12 = vector.broadcast %cst_5 : f32 to vector<128x128xf32>
    %13 = arith.subf %12, %11 : vector<128x128xf32>
    %cst_6 = arith.constant 0.000000e+00 : f32
    %14 = vector.broadcast %cst_6 : f32 to vector<128x128xf32>
    %15 = arith.maximumf %13, %14 : vector<128x128xf32>
    %16 = math.sqrt %15 : vector<128x128xf32>
    %17 = tpu.iota {dimensions = array<i32: 0>} : vector<128x1xi32>
    %18 = vector.broadcast %3 : i32 to vector<128x1xi32>
    %19 = arith.addi %18, %17 : vector<128x1xi32>
    %c0_7 = arith.constant 0 : index
    %c0_8 = arith.constant 0 : index
    %20 = vector.load %arg5[%c0_7, %c0_8] : memref<1x128xi32, #tpu.memory_space<vmem>>, vector<1x128xi32>
    %c0_9 = arith.constant 0 : index
    %c0_10 = arith.constant 0 : index
    %21 = vector.load %arg4[%c0_9, %c0_10] : memref<1x128xi32, #tpu.memory_space<vmem>>, vector<1x128xi32>
    %22 = vector.broadcast %7 : vector<128x1xi32> to vector<128x128xi32>
    %23 = vector.broadcast %21 : vector<1x128xi32> to vector<128x128xi32>
    %24 = arith.cmpi eq, %22, %23 : vector<128x128xi32>
    %25 = vector.broadcast %1 : i32 to vector<128x1xi32>
    %26 = arith.cmpi slt, %19, %25 : vector<128x1xi32>
    %27 = vector.broadcast %1 : i32 to vector<1x128xi32>
    %28 = arith.cmpi slt, %20, %27 : vector<1x128xi32>
    %29 = vector.broadcast %26 : vector<128x1xi1> to vector<128x128xi1>
    %30 = vector.broadcast %28 : vector<1x128xi1> to vector<128x128xi1>
    %31 = arith.andi %29, %30 : vector<128x128xi1>
    %32 = vector.broadcast %0 : i32 to vector<128x1xi32>
    %33 = arith.cmpi slt, %19, %32 : vector<128x1xi32>
    %34 = vector.broadcast %0 : i32 to vector<1x128xi32>
    %35 = arith.cmpi slt, %20, %34 : vector<1x128xi32>
    %36 = vector.broadcast %33 : vector<128x1xi1> to vector<128x128xi1>
    %37 = vector.broadcast %35 : vector<1x128xi1> to vector<128x128xi1>
    %38 = arith.ori %36, %37 : vector<128x128xi1>
    %39 = arith.andi %31, %38 : vector<128x128xi1>
    %40 = vector.broadcast %19 : vector<128x1xi32> to vector<128x128xi32>
    %41 = vector.broadcast %20 : vector<1x128xi32> to vector<128x128xi32>
    %42 = arith.cmpi ne, %40, %41 : vector<128x128xi32>
    %43 = arith.andi %24, %42 : vector<128x128xi1>
    %44 = arith.andi %43, %39 : vector<128x128xi1>
    %cst_11 = arith.constant dense<true> : vector<128x128xi1>
    %45 = arith.xori %24, %cst_11 : vector<128x128xi1>
    %46 = arith.andi %45, %39 : vector<128x128xi1>
    %cst_12 = arith.constant 0.000000e+00 : f32
    %47 = vector.broadcast %cst_12 : f32 to vector<128x128xf32>
    %48 = arith.select %44, %16, %47 : vector<128x128xi1>, vector<128x128xf32>
    %cst_13 = arith.constant 1.000000e+00 : f32
    %49 = vector.broadcast %cst_13 : f32 to vector<128x128xf32>
    %50 = arith.subf %49, %16 : vector<128x128xf32>
    %cst_14 = arith.constant 0.000000e+00 : f32
    %51 = vector.broadcast %cst_14 : f32 to vector<128x128xf32>
    %52 = arith.maximumf %50, %51 : vector<128x128xf32>
    %cst_15 = arith.constant 0.000000e+00 : f32
    %53 = vector.broadcast %cst_15 : f32 to vector<128x128xf32>
    %54 = arith.select %46, %52, %53 : vector<128x128xi1>, vector<128x128xf32>
    %cst_16 = arith.constant dense<0.000000e+00> : vector<128xf32>
    %55 = vector.multi_reduction <add>, %48, %cst_16 [0] : vector<128x128xf32> to vector<128xf32>
    %56 = vector.shape_cast %55 : vector<128xf32> to vector<1x128xf32>
    %c0_17 = arith.constant 0 : index
    %c0_18 = arith.constant 0 : index
    %c0_19 = arith.constant 0 : index
    %57 = vector.load %arg6[%c0_17, %c0_18, %c0_19] : memref<1x4x128xf32, #tpu.memory_space<vmem>>, vector<1x1x128xf32>
    %58 = vector.shape_cast %57 : vector<1x1x128xf32> to vector<1x128xf32>
    %59 = vector.shape_cast %56 : vector<1x128xf32> to vector<1x1x128xf32>
    tpu.vector_store %arg6[%c0_17, %c0_18, %c0_19], %59 {strides = array<i32>} : memref<1x4x128xf32, #tpu.memory_space<vmem>>, vector<1x1x128xf32>,
    %cst_20 = arith.constant 0.000000e+00 : f32
    %60 = vector.broadcast %cst_20 : f32 to vector<128x128xf32>
    %61 = arith.cmpf ogt, %48, %60 : vector<128x128xf32>
    %62 = arith.extui %61 : vector<128x128xi1> to vector<128x128xi32>
    %63 = arith.sitofp %62 : vector<128x128xi32> to vector<128x128xf32>
    %cst_21 = arith.constant dense<0.000000e+00> : vector<128xf32>
    %64 = vector.multi_reduction <add>, %63, %cst_21 [0] : vector<128x128xf32> to vector<128xf32>
    %65 = vector.shape_cast %64 : vector<128xf32> to vector<1x128xf32>
    %c0_22 = arith.constant 0 : index
    %c1_23 = arith.constant 1 : index
    %c0_24 = arith.constant 0 : index
    %66 = vector.load %arg6[%c0_22, %c1_23, %c0_24] : memref<1x4x128xf32, #tpu.memory_space<vmem>>, vector<1x1x128xf32>
    %67 = vector.shape_cast %66 : vector<1x1x128xf32> to vector<1x128xf32>
    %68 = vector.shape_cast %65 : vector<1x128xf32> to vector<1x1x128xf32>
    tpu.vector_store %arg6[%c0_22, %c1_23, %c0_24], %68 {strides = array<i32>} : memref<1x4x128xf32, #tpu.memory_space<vmem>>, vector<1x1x128xf32>,
    %cst_25 = arith.constant dense<0.000000e+00> : vector<128xf32>
    %69 = vector.multi_reduction <add>, %54, %cst_25 [0] : vector<128x128xf32> to vector<128xf32>
    %70 = vector.shape_cast %69 : vector<128xf32> to vector<1x128xf32>
    %c0_26 = arith.constant 0 : index
    %c2 = arith.constant 2 : index
    %c0_27 = arith.constant 0 : index
    %71 = vector.load %arg6[%c0_26, %c2, %c0_27] : memref<1x4x128xf32, #tpu.memory_space<vmem>>, vector<1x1x128xf32>
    %72 = vector.shape_cast %71 : vector<1x1x128xf32> to vector<1x128xf32>
    %73 = vector.shape_cast %70 : vector<1x128xf32> to vector<1x1x128xf32>
    tpu.vector_store %arg6[%c0_26, %c2, %c0_27], %73 {strides = array<i32>} : memref<1x4x128xf32, #tpu.memory_space<vmem>>, vector<1x1x128xf32>,
    %cst_28 = arith.constant 0.000000e+00 : f32
    %74 = vector.broadcast %cst_28 : f32 to vector<128x128xf32>
    %75 = arith.cmpf ogt, %54, %74 : vector<128x128xf32>
    %76 = arith.extui %75 : vector<128x128xi1> to vector<128x128xi32>
    %77 = arith.sitofp %76 : vector<128x128xi32> to vector<128x128xf32>
    %cst_29 = arith.constant dense<0.000000e+00> : vector<128xf32>
    %78 = vector.multi_reduction <add>, %77, %cst_29 [0] : vector<128x128xf32> to vector<128xf32>
    %79 = vector.shape_cast %78 : vector<128xf32> to vector<1x128xf32>
    %c0_30 = arith.constant 0 : index
    %c3 = arith.constant 3 : index
    %c0_31 = arith.constant 0 : index
    %80 = vector.load %arg6[%c0_30, %c3, %c0_31] : memref<1x4x128xf32, #tpu.memory_space<vmem>>, vector<1x1x128xf32>
    %81 = vector.shape_cast %80 : vector<1x1x128xf32> to vector<1x128xf32>
    %82 = vector.shape_cast %79 : vector<1x128xf32> to vector<1x1x128xf32>
    tpu.vector_store %arg6[%c0_30, %c3, %c0_31], %82 {strides = array<i32>} : memref<1x4x128xf32, #tpu.memory_space<vmem>>, vector<1x1x128xf32>,
    return
  }
  func.func @transform_0(%arg0: i32, %arg1: memref<2xi32, #tpu.memory_space<smem>>) -> (i32, i32) {
    %c0_i32 = arith.constant 0 : i32
    %c0_i32_0 = arith.constant 0 : i32
    %c0_i32_1 = arith.constant 0 : i32
    return %c0_i32, %c0_i32_0 : i32, i32
  }
  func.func @transform_1(%arg0: i32, %arg1: memref<2xi32, #tpu.memory_space<smem>>) -> (i32, i32) {
    %c0_i32 = arith.constant 0 : i32
    %c0_i32_0 = arith.constant 0 : i32
    %c0_i32_1 = arith.constant 0 : i32
    return %c0_i32, %c0_i32_0 : i32, i32
  }
  func.func @transform_2(%arg0: i32, %arg1: memref<2xi32, #tpu.memory_space<smem>>) -> (i32, i32) {
    %c0_i32 = arith.constant 0 : i32
    %c0_i32_0 = arith.constant 0 : i32
    %c0_i32_1 = arith.constant 0 : i32
    return %c0_i32, %c0_i32_0 : i32, i32
  }
  func.func @transform_3(%arg0: i32, %arg1: memref<2xi32, #tpu.memory_space<smem>>) -> (i32, i32) {
    %c0_i32 = arith.constant 0 : i32
    %c0_i32_0 = arith.constant 0 : i32
    %c0_i32_1 = arith.constant 0 : i32
    return %c0_i32, %c0_i32_0 : i32, i32
  }
  func.func @transform_4(%arg0: i32, %arg1: memref<2xi32, #tpu.memory_space<smem>>) -> (i32, i32, i32) {
    %c0_i32 = arith.constant 0 : i32
    %c0_i32_0 = arith.constant 0 : i32
    %c0_i32_1 = arith.constant 0 : i32
    return %arg0, %c0_i32, %c0_i32_0 : i32, i32, i32
  }
}

</mosaic_0001>

<llo_original>
// kernel: cross_batch_memory_forward.1
$region0: #{cross_batch_memory_forward.1}
  #allocation0 [shape = 'u32[]', space=smem, size = 0x4, offset = 0x4, fixed_abs, tag = 'smem constant byte address 0x4 - core index']
  #allocation1 [shape = 'u32[144,128]{1,0:T(1,128)}', space=vmem, size = 0x12000, scoped, tag = 'internal scratch']
  #allocation2 [shape = 's32[1]{0}', space=sflag, size = 0x4, scoped, tag = 'scoped memory for cross_batch_memory_forward.1']
  #allocation3 [shape = 'u8[512]{0}', space=smem, size = 0x200, scoped, tag = 'prefetched SMEM operand 0']
  %s0 = inlined_call_operand.vmem [shape: s32[2], index: 0, kind: input, shape index: {}]
  %s1 = inlined_call_operand.vmem [shape: bf16[128,32], index: 1, kind: input, shape index: {}]
  %s2 = inlined_call_operand.vmem [shape: s32[128,1], index: 2, kind: input, shape index: {}]
  %s3 = inlined_call_operand.vmem [shape: s32[1,128], index: 3, kind: input, shape index: {}]
  %s4 = inlined_call_operand.vmem [shape: s32[1,128], index: 4, kind: input, shape index: {}]
  %s5 = inlined_call_operand.vmem [shape: f32[1,4,128], index: 5, kind: output, shape index: {}]
  %s6 = sld [smem:[#allocation0]]
  $region26: #{cross_batch_memory_forward.1} parent=0
    _
  %s8 = ssub.s32 1, %s6
  %s9 = scalar_select 0, %s8, %s6
  %s10 = sshll.u32 %s0, 4
  %s11 = int_to_ptr.vmem [resolvable:$true] %s10
  %13 = dma.vmem_to_smem %s11, 16, [#allocation3], [#allocation2]
  %14 = dma.done [#allocation2], 16
  %15 = sfence
  // Predicated region
  $region2: #{cross_batch_memory_forward.1} parent=0 // pred_check
    _
  $region3: #{cross_batch_memory_forward.1} parent=0 // pred_check_branch
    %17 = sbr.rel (0) target = $region5
  $region4: #{cross_batch_memory_forward.1} parent=0 // pred_region
    _
  $region5: #{cross_batch_memory_forward.1} parent=0 // pred_fallthru
    _
  // Predicated region
  $region6: #{cross_batch_memory_forward.1} parent=0 // pred_check
    _
  $region7: #{cross_batch_memory_forward.1} parent=0 // pred_check_branch
    %19 = sbr.rel (0) target = $region9
  $region8: #{cross_batch_memory_forward.1} parent=0 // pred_region
    _
  $region9: #{cross_batch_memory_forward.1} parent=0 // pred_fallthru
    _
  // Predicated region
  $region10: #{cross_batch_memory_forward.1} parent=0 // pred_check
    _
  $region11: #{cross_batch_memory_forward.1} parent=0 // pred_check_branch
    %21 = sbr.rel (0) target = $region13
  $region12: #{cross_batch_memory_forward.1} parent=0 // pred_region
    _
  $region13: #{cross_batch_memory_forward.1} parent=0 // pred_fallthru
    _
  // Predicated region
  $region14: #{cross_batch_memory_forward.1} parent=0 // pred_check
    _
  $region15: #{cross_batch_memory_forward.1} parent=0 // pred_check_branch
    %23 = sbr.rel (0) target = $region17
  $region16: #{cross_batch_memory_forward.1} parent=0 // pred_region
    _
  $region17: #{cross_batch_memory_forward.1} parent=0 // pred_fallthru
    _
  %s25 = sld [smem:[#allocation3]]
  %s26 = sld [smem:[#allocation3 + $0x1]]
  %s27 = smul.u32 0, 128
  %s28 = sshra.s32 %s27, 3
  %s29 = sand.u32 %s27, 7
  %s30 = smul.addr %s28, 4
  %s31 = scalar_lea.vmem %s1, %s30
  %v32 = vld [vmem:[%s31] sm:$0xf]
  %v33 = vld [vmem:[%s31 + $0x4] sm:$0xf]
  %v34 = vld [vmem:[%s31 + $0x8] sm:$0xf]
  %v35 = vld [vmem:[%s31 + $0xc] sm:$0xf]
  %v36 = vld [vmem:[%s31 + $0x10] sm:$0xf]
  %v37 = vld [vmem:[%s31 + $0x14] sm:$0xf]
  %v38 = vld [vmem:[%s31 + $0x18] sm:$0xf]
  %v39 = vld [vmem:[%s31 + $0x1c] sm:$0xf]
  %v40 = vld [vmem:[%s31 + $0x20] sm:$0xf]
  %v41 = vld [vmem:[%s31 + $0x24] sm:$0xf]
  %v42 = vld [vmem:[%s31 + $0x28] sm:$0xf]
  %v43 = vld [vmem:[%s31 + $0x2c] sm:$0xf]
  %v44 = vld [vmem:[%s31 + $0x30] sm:$0xf]
  %v45 = vld [vmem:[%s31 + $0x34] sm:$0xf]
  %v46 = vld [vmem:[%s31 + $0x38] sm:$0xf]
  %v47 = vld [vmem:[%s31 + $0x3c] sm:$0xf]
  %s48 = scalar_lea.vmem %s2, %s27
  %v49 = vld [vmem:[%s48] sm:$0xff]
  %v50 = vld [vmem:[%s48 + $0x8] sm:$0xff]
  %v51 = vld [vmem:[%s48 + $0x10] sm:$0xff]
  %v52 = vld [vmem:[%s48 + $0x18] sm:$0xff]
  %v53 = vld [vmem:[%s48 + $0x20] sm:$0xff]
  %v54 = vld [vmem:[%s48 + $0x28] sm:$0xff]
  %v55 = vld [vmem:[%s48 + $0x30] sm:$0xff]
  %v56 = vld [vmem:[%s48 + $0x38] sm:$0xff]
  %v57 = vld [vmem:[%s48 + $0x40] sm:$0xff]
  %v58 = vld [vmem:[%s48 + $0x48] sm:$0xff]
  %v59 = vld [vmem:[%s48 + $0x50] sm:$0xff]
  %v60 = vld [vmem:[%s48 + $0x58] sm:$0xff]
  %v61 = vld [vmem:[%s48 + $0x60] sm:$0xff]
  %v62 = vld [vmem:[%s48 + $0x68] sm:$0xff]
  %v63 = vld [vmem:[%s48 + $0x70] sm:$0xff]
  %v64 = vld [vmem:[%s48 + $0x78] sm:$0xff]
  %v65 = vld [vmem:[%s1] sm:$0xf]
  %v66 = vld [vmem:[%s1 + $0x4] sm:$0xf]
  %v67 = vld [vmem:[%s1 + $0x8] sm:$0xf]
  %v68 = vld [vmem:[%s1 + $0xc] sm:$0xf]
  %v69 = vld [vmem:[%s1 + $0x10] sm:$0xf]
  %v70 = vld [vmem:[%s1 + $0x14] sm:$0xf]
  %v71 = vld [vmem:[%s1 + $0x18] sm:$0xf]
  %v72 = vld [vmem:[%s1 + $0x1c] sm:$0xf]
  %v73 = vld [vmem:[%s1 + $0x20] sm:$0xf]
  %v74 = vld [vmem:[%s1 + $0x24] sm:$0xf]
  %v75 = vld [vmem:[%s1 + $0x28] sm:$0xf]
  %v76 = vld [vmem:[%s1 + $0x2c] sm:$0xf]
  %v77 = vld [vmem:[%s1 + $0x30] sm:$0xf]
  %v78 = vld [vmem:[%s1 + $0x34] sm:$0xf]
  %v79 = vld [vmem:[%s1 + $0x38] sm:$0xf]
  %v80 = vld [vmem:[%s1 + $0x3c] sm:$0xf]
  %v97 = vunpack.c.l.b16 %v32
  %v98 = vunpack.c.l.b16 %v33
  %v99 = vunpack.c.l.b16 %v34
  %v100 = vunpack.c.l.b16 %v35
  %v101 = vunpack.c.l.b16 %v36
  %v102 = vunpack.c.l.b16 %v37
  %v103 = vunpack.c.l.b16 %v38
  %v104 = vunpack.c.l.b16 %v39
  %v105 = vunpack.c.l.b16 %v40
  %v106 = vunpack.c.l.b16 %v41
  %v107 = vunpack.c.l.b16 %v42
  %v108 = vunpack.c.l.b16 %v43
  %v109 = vunpack.c.l.b16 %v44
  %v110 = vunpack.c.l.b16 %v45
  %v111 = vunpack.c.l.b16 %v46
  %v112 = vunpack.c.l.b16 %v47
  %v113 = vpack.c.b16 %v98, %v97
  %v114 = vpack.c.b16 %v100, %v99
  %v115 = vpack.c.b16 %v102, %v101
  %v116 = vpack.c.b16 %v104, %v103
  %v117 = vpack.c.b16 %v106, %v105
  %v118 = vpack.c.b16 %v108, %v107
  %v119 = vpack.c.b16 %v110, %v109
  %v120 = vpack.c.b16 %v112, %v111
  %v137 = vunpack.c.l.b16 %v65
  %v138 = vunpack.c.l.b16 %v66
  %v139 = vunpack.c.l.b16 %v67
  %v140 = vunpack.c.l.b16 %v68
  %v141 = vunpack.c.l.b16 %v69
  %v142 = vunpack.c.l.b16 %v70
  %v143 = vunpack.c.l.b16 %v71
  %v144 = vunpack.c.l.b16 %v72
  %v145 = vunpack.c.l.b16 %v73
  %v146 = vunpack.c.l.b16 %v74
  %v147 = vunpack.c.l.b16 %v75
  %v148 = vunpack.c.l.b16 %v76
  %v149 = vunpack.c.l.b16 %v77
  %v150 = vunpack.c.l.b16 %v78
  %v151 = vunpack.c.l.b16 %v79
  %v152 = vunpack.c.l.b16 %v80
  %v153 = vpack.c.b16 %v138, %v137
  %v154 = vpack.c.b16 %v140, %v139
  %v155 = vpack.c.b16 %v142, %v141
  %v156 = vpack.c.b16 %v144, %v143
  %v157 = vpack.c.b16 %v146, %v145
  %v158 = vpack.c.b16 %v148, %v147
  %v159 = vpack.c.b16 %v150, %v149
  %v160 = vpack.c.b16 %v152, %v151
  %vm161 = vcmask 261120
  %v163 = vsel %vm161, %v113, 0
  %v166 = vsel %vm161, %v114, 0
  %v169 = vsel %vm161, %v115, 0
  %v172 = vsel %vm161, %v116, 0
  %v175 = vsel %vm161, %v117, 0
  %v178 = vsel %vm161, %v118, 0
  %v181 = vsel %vm161, %v119, 0
  %v184 = vsel %vm161, %v120, 0
  %v187 = vsel %vm161, %v153, 0
  %v190 = vsel %vm161, %v154, 0
  %v193 = vsel %vm161, %v155, 0
  %v196 = vsel %vm161, %v156, 0
  %v199 = vsel %vm161, %v157, 0
  %v202 = vsel %vm161, %v158, 0
  %v205 = vsel %vm161, %v159, 0
  %v208 = vsel %vm161, %v160, 0
  %210 = vmatprep.subr.bf16.mxu0 0
  %211 = vmatpush1.bf16.xpose.msra.mxu0 %v187
  %212 = vmatprep.subr.bf16.mxu0 0
  %213 = vmatpush1.bf16.xpose.msra.mxu0 %v190
  %214 = vmatprep.subr.bf16.mxu0 0
  %215 = vmatpush1.bf16.xpose.msra.mxu0 %v193
  %216 = vmatprep.subr.bf16.mxu0 0
  %217 = vmatpush1.bf16.xpose.msra.mxu0 %v196
  %218 = vmatprep.subr.bf16.mxu0 0
  %219 = vmatpush1.bf16.xpose.msra.mxu0 %v199
  %220 = vmatprep.subr.bf16.mxu0 0
  %221 = vmatpush1.bf16.xpose.msra.mxu0 %v202
  %222 = vmatprep.subr.bf16.mxu0 0
  %223 = vmatpush1.bf16.xpose.msra.mxu0 %v205
  %224 = vmatprep.subr.bf16.mxu0 0
  %225 = vmatpush1.bf16.xpose.msra.mxu0 %v208
  %226 = vmatprep.subr.bf16.mxu0 0
  %227 = vmatpush1.bf16.xpose.msra.mxu0 0
  %228 = vmatprep.subr.bf16.mxu0 0
  %229 = vmatpush1.bf16.xpose.msra.mxu0 0
  %230 = vmatprep.subr.bf16.mxu0 0
  %231 = vmatpush1.bf16.xpose.msra.mxu0 0
  %232 = vmatprep.subr.bf16.mxu0 0
  %233 = vmatpush1.bf16.xpose.msra.mxu0 0
  %234 = vmatprep.subr.bf16.mxu0 0
  %235 = vmatpush1.bf16.xpose.msra.mxu0 0
  %236 = vmatprep.subr.bf16.mxu0 0
  %237 = vmatpush1.bf16.xpose.msra.mxu0 0
  %238 = vmatprep.subr.bf16.mxu0 0
  %239 = vmatpush1.bf16.xpose.msra.mxu0 0
  %240 = vmatprep.subr.bf16.mxu0 0
  %241 = vmatpush1.bf16.xpose.msra.mxu0 0
  %242 = vmatprep.mubr.bf16.mxu0 0
  %243 = vmatmul.mubr.bf16.gmra.mrb[0].mxu0 %v163
  %v244 = vpop.f32.mrb[0].mxu0
  %v245 = vadd.f32 0.0, %v244
  %v246 = vpop.f32.mrb[0].mxu0
  %v247 = vpop.f32.mrb[0].mxu0
  %v248 = vadd.f32 0.0, %v247
  %v249 = vpop.f32.mrb[0].mxu0
  %250 = vmatprep.mubr.bf16.mxu0 0
  %251 = vmatmul.mubr.bf16.gmra.mrb[0].mxu0 %v166
  %v252 = vpop.f32.mrb[0].mxu0
  %v253 = vadd.f32 0.0, %v252
  %v254 = vpop.f32.mrb[0].mxu0
  %v255 = vpop.f32.mrb[0].mxu0
  %v256 = vadd.f32 0.0, %v255
  %v257 = vpop.f32.mrb[0].mxu0
  %258 = vmatprep.mubr.bf16.mxu0 0
  %259 = vmatmul.mubr.bf16.gmra.mrb[0].mxu0 %v169
  %v260 = vpop.f32.mrb[0].mxu0
  %v261 = vadd.f32 0.0, %v260
  %v262 = vpop.f32.mrb[0].mxu0
  %v263 = vpop.f32.mrb[0].mxu0
  %v264 = vadd.f32 0.0, %v263
  %v265 = vpop.f32.mrb[0].mxu0
  %266 = vmatprep.mubr.bf16.mxu0 0
  %267 = vmatmul.mubr.bf16.gmra.mrb[0].mxu0 %v172
  %v268 = vpop.f32.mrb[0].mxu0
  %v269 = vadd.f32 0.0, %v268
  %v270 = vpop.f32.mrb[0].mxu0
  %v271 = vpop.f32.mrb[0].mxu0
  %v272 = vadd.f32 0.0, %v271
  %v273 = vpop.f32.mrb[0].mxu0
  %274 = vmatprep.mubr.bf16.mxu0 0
  %275 = vmatmul.mubr.bf16.gmra.mrb[0].mxu0 %v175
  %v276 = vpop.f32.mrb[0].mxu0
  %v277 = vadd.f32 0.0, %v276
  %v278 = vpop.f32.mrb[0].mxu0
  %v279 = vpop.f32.mrb[0].mxu0
  %v280 = vadd.f32 0.0, %v279
  %v281 = vpop.f32.mrb[0].mxu0
  %282 = vmatprep.mubr.bf16.mxu0 0
  %283 = vmatmul.mubr.bf16.gmra.mrb[0].mxu0 %v178
  %v284 = vpop.f32.mrb[0].mxu0
  %v285 = vadd.f32 0.0, %v284
  %v286 = vpop.f32.mrb[0].mxu0
  %v287 = vpop.f32.mrb[0].mxu0
  %v288 = vadd.f32 0.0, %v287
  %v289 = vpop.f32.mrb[0].mxu0
  %290 = vmatprep.mubr.bf16.mxu0 0
  %291 = vmatmul.mubr.bf16.gmra.mrb[0].mxu0 %v181
  %v292 = vpop.f32.mrb[0].mxu0
  %v293 = vadd.f32 0.0, %v292
  %v294 = vpop.f32.mrb[0].mxu0
  %v295 = vpop.f32.mrb[0].mxu0
  %v296 = vadd.f32 0.0, %v295
  %v297 = vpop.f32.mrb[0].mxu0
  %298 = vmatprep.mubr.bf16.mxu0 0
  %299 = vmatmul.mubr.bf16.gmra.mrb[0].mxu0 %v184
  %v300 = vpop.f32.mrb[0].mxu0
  %v301 = vadd.f32 0.0, %v300
  %v302 = vpop.f32.mrb[0].mxu0
  %v303 = vpop.f32.mrb[0].mxu0
  %v304 = vadd.f32 0.0, %v303
  %v305 = vpop.f32.mrb[0].mxu0
  %306 = vdwg.mxu0
  %v307 = vmul.f32 %v245, 2.0
  %v308 = vmul.f32 %v248, 2.0
  %v309 = vmul.f32 %v253, 2.0
  %v310 = vmul.f32 %v256, 2.0
  %v311 = vmul.f32 %v261, 2.0
  %v312 = vmul.f32 %v264, 2.0
  %v313 = vmul.f32 %v269, 2.0
  %v314 = vmul.f32 %v272, 2.0
  %v315 = vmul.f32 %v277, 2.0
  %v316 = vmul.f32 %v280, 2.0
  %v317 = vmul.f32 %v285, 2.0
  %v318 = vmul.f32 %v288, 2.0
  %v319 = vmul.f32 %v293, 2.0
  %v320 = vmul.f32 %v296, 2.0
  %v321 = vmul.f32 %v301, 2.0
  %v322 = vmul.f32 %v304, 2.0
  %v323 = vsub.f32 2.0, %v307
  %v324 = vsub.f32 2.0, %v308
  %v325 = vsub.f32 2.0, %v309
  %v326 = vsub.f32 2.0, %v310
  %v327 = vsub.f32 2.0, %v311
  %v328 = vsub.f32 2.0, %v312
  %v329 = vsub.f32 2.0, %v313
  %v330 = vsub.f32 2.0, %v314
  %v331 = vsub.f32 2.0, %v315
  %v332 = vsub.f32 2.0, %v316
  %v333 = vsub.f32 2.0, %v317
  %v334 = vsub.f32 2.0, %v318
  %v335 = vsub.f32 2.0, %v319
  %v336 = vsub.f32 2.0, %v320
  %v337 = vsub.f32 2.0, %v321
  %v338 = vsub.f32 2.0, %v322
  %v339 = vmax.f32 %v323, 0.0
  %v340 = vmax.f32 %v324, 0.0
  %v341 = vmax.f32 %v325, 0.0
  %v342 = vmax.f32 %v326, 0.0
  %v343 = vmax.f32 %v327, 0.0
  %v344 = vmax.f32 %v328, 0.0
  %v345 = vmax.f32 %v329, 0.0
  %v346 = vmax.f32 %v330, 0.0
  %v347 = vmax.f32 %v331, 0.0
  %v348 = vmax.f32 %v332, 0.0
  %v349 = vmax.f32 %v333, 0.0
  %v350 = vmax.f32 %v334, 0.0
  %v351 = vmax.f32 %v335, 0.0
  %v352 = vmax.f32 %v336, 0.0
  %v353 = vmax.f32 %v337, 0.0
  %v354 = vmax.f32 %v338, 0.0
  %v355 = vrsqrt.pop %v339
  %v356 = vmul.f32 %v339, %v355
  %vm357 = vcmp.eq.f32.partialorder %v339, inf
  %v358 = vsel %vm357, %v339, %v356
  %vm359 = vcmp.eq.f32.partialorder %v339, 0.0
  %v360 = vand.u32 %v339, 2147483648
  %v361 = vsel %vm359, %v360, %v358
  %v362 = vrsqrt.pop %v340
  %v363 = vmul.f32 %v340, %v362
  %vm364 = vcmp.eq.f32.partialorder %v340, inf
  %v365 = vsel %vm364, %v340, %v363
  %vm366 = vcmp.eq.f32.partialorder %v340, 0.0
  %v367 = vand.u32 %v340, 2147483648
  %v368 = vsel %vm366, %v367, %v365
  %v369 = vrsqrt.pop %v341
  %v370 = vmul.f32 %v341, %v369
  %vm371 = vcmp.eq.f32.partialorder %v341, inf
  %v372 = vsel %vm371, %v341, %v370
  %vm373 = vcmp.eq.f32.partialorder %v341, 0.0
  %v374 = vand.u32 %v341, 2147483648
  %v375 = vsel %vm373, %v374, %v372
  %v376 = vrsqrt.pop %v342
  %v377 = vmul.f32 %v342, %v376
  %vm378 = vcmp.eq.f32.partialorder %v342, inf
  %v379 = vsel %vm378, %v342, %v377
  %vm380 = vcmp.eq.f32.partialorder %v342, 0.0
  %v381 = vand.u32 %v342, 2147483648
  %v382 = vsel %vm380, %v381, %v379
  %v383 = vrsqrt.pop %v343
  %v384 = vmul.f32 %v343, %v383
  %vm385 = vcmp.eq.f32.partialorder %v343, inf
  %v386 = vsel %vm385, %v343, %v384
  %vm387 = vcmp.eq.f32.partialorder %v343, 0.0
  %v388 = vand.u32 %v343, 2147483648
  %v389 = vsel %vm387, %v388, %v386
  %v390 = vrsqrt.pop %v344
  %v391 = vmul.f32 %v344, %v390
  %vm392 = vcmp.eq.f32.partialorder %v344, inf
  %v393 = vsel %vm392, %v344, %v391
  %vm394 = vcmp.eq.f32.partialorder %v344, 0.0
  %v395 = vand.u32 %v344, 2147483648
  %v396 = vsel %vm394, %v395, %v393
  %v397 = vrsqrt.pop %v345
  %v398 = vmul.f32 %v345, %v397
  %vm399 = vcmp.eq.f32.partialorder %v345, inf
  %v400 = vsel %vm399, %v345, %v398
  %vm401 = vcmp.eq.f32.partialorder %v345, 0.0
  %v402 = vand.u32 %v345, 2147483648
  %v403 = vsel %vm401, %v402, %v400
  %v404 = vrsqrt.pop %v346
  %v405 = vmul.f32 %v346, %v404
  %vm406 = vcmp.eq.f32.partialorder %v346, inf
  %v407 = vsel %vm406, %v346, %v405
  %vm408 = vcmp.eq.f32.partialorder %v346, 0.0
  %v409 = vand.u32 %v346, 2147483648
  %v410 = vsel %vm408, %v409, %v407
  %v411 = vrsqrt.pop %v347
  %v412 = vmul.f32 %v347, %v411
  %vm413 = vcmp.eq.f32.partialorder %v347, inf
  %v414 = vsel %vm413, %v347, %v412
  %vm415 = vcmp.eq.f32.partialorder %v347, 0.0
  %v416 = vand.u32 %v347, 2147483648
  %v417 = vsel %vm415, %v416, %v414
  %v418 = vrsqrt.pop %v348
  %v419 = vmul.f32 %v348, %v418
  %vm420 = vcmp.eq.f32.partialorder %v348, inf
  %v421 = vsel %vm420, %v348, %v419
  %vm422 = vcmp.eq.f32.partialorder %v348, 0.0
  %v423 = vand.u32 %v348, 2147483648
  %v424 = vsel %vm422, %v423, %v421
  %v425 = vrsqrt.pop %v349
  %v426 = vmul.f32 %v349, %v425
  %vm427 = vcmp.eq.f32.partialorder %v349, inf
  %v428 = vsel %vm427, %v349, %v426
  %vm429 = vcmp.eq.f32.partialorder %v349, 0.0
  %v430 = vand.u32 %v349, 2147483648
  %v431 = vsel %vm429, %v430, %v428
  %v432 = vrsqrt.pop %v350
  %v433 = vmul.f32 %v350, %v432
  %vm434 = vcmp.eq.f32.partialorder %v350, inf
  %v435 = vsel %vm434, %v350, %v433
  %vm436 = vcmp.eq.f32.partialorder %v350, 0.0
  %v437 = vand.u32 %v350, 2147483648
  %v438 = vsel %vm436, %v437, %v435
  %v439 = vrsqrt.pop %v351
  %v440 = vmul.f32 %v351, %v439
  %vm441 = vcmp.eq.f32.partialorder %v351, inf
  %v442 = vsel %vm441, %v351, %v440
  %vm443 = vcmp.eq.f32.partialorder %v351, 0.0
  %v444 = vand.u32 %v351, 2147483648
  %v445 = vsel %vm443, %v444, %v442
  %v446 = vrsqrt.pop %v352
  %v447 = vmul.f32 %v352, %v446
  %vm448 = vcmp.eq.f32.partialorder %v352, inf
  %v449 = vsel %vm448, %v352, %v447
  %vm450 = vcmp.eq.f32.partialorder %v352, 0.0
  %v451 = vand.u32 %v352, 2147483648
  %v452 = vsel %vm450, %v451, %v449
  %v453 = vrsqrt.pop %v353
  %v454 = vmul.f32 %v353, %v453
  %vm455 = vcmp.eq.f32.partialorder %v353, inf
  %v456 = vsel %vm455, %v353, %v454
  %vm457 = vcmp.eq.f32.partialorder %v353, 0.0
  %v458 = vand.u32 %v353, 2147483648
  %v459 = vsel %vm457, %v458, %v456
  %v460 = vrsqrt.pop %v354
  %v461 = vmul.f32 %v354, %v460
  %vm462 = vcmp.eq.f32.partialorder %v354, inf
  %v463 = vsel %vm462, %v354, %v461
  %vm464 = vcmp.eq.f32.partialorder %v354, 0.0
  %v465 = vand.u32 %v354, 2147483648
  %v466 = vsel %vm464, %v465, %v463
  %v467 = vlaneseq
  %v468 = vshrl.u32 %v467, 7
  %v469 = vadd.s32 %v468, 8
  %v470 = vadd.s32 %v468, 16
  %v471 = vadd.s32 %v468, 24
  %v472 = vadd.s32 %v468, 32
  %v473 = vadd.s32 %v468, 40
  %v474 = vadd.s32 %v468, 48
  %v475 = vadd.s32 %v468, 56
  %v476 = vadd.s32 %v468, 64
  %v477 = vadd.s32 %v468, 72
  %v478 = vadd.s32 %v468, 80
  %v479 = vadd.s32 %v468, 88
  %v480 = vadd.s32 %v468, 96
  %v481 = vadd.s32 %v468, 104
  %v482 = vadd.s32 %v468, 112
  %v483 = vadd.s32 %v468, 120
  %v484 = vstv %s27
  %v485 = vadd.s32 %v484, %v468
  %v486 = vadd.s32 %v484, %v469
  %v487 = vadd.s32 %v484, %v470
  %v488 = vadd.s32 %v484, %v471
  %v489 = vadd.s32 %v484, %v472
  %v490 = vadd.s32 %v484, %v473
  %v491 = vadd.s32 %v484, %v474
  %v492 = vadd.s32 %v484, %v475
  %v493 = vadd.s32 %v484, %v476
  %v494 = vadd.s32 %v484, %v477
  %v495 = vadd.s32 %v484, %v478
  %v496 = vadd.s32 %v484, %v479
  %v497 = vadd.s32 %v484, %v480
  %v498 = vadd.s32 %v484, %v481
  %v499 = vadd.s32 %v484, %v482
  %v500 = vadd.s32 %v484, %v483
  %v501 = vld [vmem:[%s4] sm:$0x1]
  %v502 = vld [vmem:[%s3] sm:$0x1]
  %503 = vset.pattern.permute.xlu0 0
  %504 = vperm.xlu0 %503, %v49
  %v505 = vpop.permute.xlu0 %504
  %506 = vset.pattern.permute.xlu0 0
  %507 = vperm.xlu0 %506, %v50
  %v508 = vpop.permute.xlu0 %507
  %509 = vset.pattern.permute.xlu0 0
  %510 = vperm.xlu0 %509, %v51
  %v511 = vpop.permute.xlu0 %510
  %512 = vset.pattern.permute.xlu0 0
  %513 = vperm.xlu0 %512, %v52
  %v514 = vpop.permute.xlu0 %513
  %515 = vset.pattern.permute.xlu0 0
  %516 = vperm.xlu0 %515, %v53
  %v517 = vpop.permute.xlu0 %516
  %518 = vset.pattern.permute.xlu0 0
  %519 = vperm.xlu0 %518, %v54
  %v520 = vpop.permute.xlu0 %519
  %521 = vset.pattern.permute.xlu0 0
  %522 = vperm.xlu0 %521, %v55
  %v523 = vpop.permute.xlu0 %522
  %524 = vset.pattern.permute.xlu0 0
  %525 = vperm.xlu0 %524, %v56
  %v526 = vpop.permute.xlu0 %525
  %527 = vset.pattern.permute.xlu0 0
  %528 = vperm.xlu0 %527, %v57
  %v529 = vpop.permute.xlu0 %528
  %530 = vset.pattern.permute.xlu0 0
  %531 = vperm.xlu0 %530, %v58
  %v532 = vpop.permute.xlu0 %531
  %533 = vset.pattern.permute.xlu0 0
  %534 = vperm.xlu0 %533, %v59
  %v535 = vpop.permute.xlu0 %534
  %536 = vset.pattern.permute.xlu0 0
  %537 = vperm.xlu0 %536, %v60
  %v538 = vpop.permute.xlu0 %537
  %539 = vset.pattern.permute.xlu0 0
  %540 = vperm.xlu0 %539, %v61
  %v541 = vpop.permute.xlu0 %540
  %542 = vset.pattern.permute.xlu0 0
  %543 = vperm.xlu0 %542, %v62
  %v544 = vpop.permute.xlu0 %543
  %545 = vset.pattern.permute.xlu0 0
  %546 = vperm.xlu0 %545, %v63
  %v547 = vpop.permute.xlu0 %546
  %548 = vset.pattern.permute.xlu0 0
  %549 = vperm.xlu0 %548, %v64
  %v550 = vpop.permute.xlu0 %549
  %v551 = vlaneseq
  %v552 = vshrl.u32 %v551, 7
  %v553 = vsub.s32 0, %v552
  %v554 = vrot.slane %v502, %v553
  %vm555 = vcmp.eq.s32.totalorder %v505, %v554
  %vm556 = vcmp.eq.s32.totalorder %v508, %v554
  %vm557 = vcmp.eq.s32.totalorder %v511, %v554
  %vm558 = vcmp.eq.s32.totalorder %v514, %v554
  %vm559 = vcmp.eq.s32.totalorder %v517, %v554
  %vm560 = vcmp.eq.s32.totalorder %v520, %v554
  %vm561 = vcmp.eq.s32.totalorder %v523, %v554
  %vm562 = vcmp.eq.s32.totalorder %v526, %v554
  %vm563 = vcmp.eq.s32.totalorder %v529, %v554
  %vm564 = vcmp.eq.s32.totalorder %v532, %v554
  %vm565 = vcmp.eq.s32.totalorder %v535, %v554
  %vm566 = vcmp.eq.s32.totalorder %v538, %v554
  %vm567 = vcmp.eq.s32.totalorder %v541, %v554
  %vm568 = vcmp.eq.s32.totalorder %v544, %v554
  %vm569 = vcmp.eq.s32.totalorder %v547, %v554
  %vm570 = vcmp.eq.s32.totalorder %v550, %v554
  %v571 = vstv %s26
  %vm572 = vcmp.lt.s32.totalorder %v485, %v571
  %vm573 = vcmp.lt.s32.totalorder %v486, %v571
  %vm574 = vcmp.lt.s32.totalorder %v487, %v571
  %vm575 = vcmp.lt.s32.totalorder %v488, %v571
  %vm576 = vcmp.lt.s32.totalorder %v489, %v571
  %vm577 = vcmp.lt.s32.totalorder %v490, %v571
  %vm578 = vcmp.lt.s32.totalorder %v491, %v571
  %vm579 = vcmp.lt.s32.totalorder %v492, %v571
  %vm580 = vcmp.lt.s32.totalorder %v493, %v571
  %vm581 = vcmp.lt.s32.totalorder %v494, %v571
  %vm582 = vcmp.lt.s32.totalorder %v495, %v571
  %vm583 = vcmp.lt.s32.totalorder %v496, %v571
  %vm584 = vcmp.lt.s32.totalorder %v497, %v571
  %vm585 = vcmp.lt.s32.totalorder %v498, %v571
  %vm586 = vcmp.lt.s32.totalorder %v499, %v571
  %vm587 = vcmp.lt.s32.totalorder %v500, %v571
  %vm588 = vcmp.lt.s32.totalorder %v501, %v571
  %v589 = vsel %vm572, 1, 0
  %v590 = vsel %vm573, 1, 0
  %v591 = vsel %vm574, 1, 0
  %v592 = vsel %vm575, 1, 0
  %v593 = vsel %vm576, 1, 0
  %v594 = vsel %vm577, 1, 0
  %v595 = vsel %vm578, 1, 0
  %v596 = vsel %vm579, 1, 0
  %v597 = vsel %vm580, 1, 0
  %v598 = vsel %vm581, 1, 0
  %v599 = vsel %vm582, 1, 0
  %v600 = vsel %vm583, 1, 0
  %v601 = vsel %vm584, 1, 0
  %v602 = vsel %vm585, 1, 0
  %v603 = vsel %vm586, 1, 0
  %v604 = vsel %vm587, 1, 0
  %vm605 = vcmp.eq.s32.totalorder %v589, 1
  %vm606 = vcmp.eq.s32.totalorder %v590, 1
  %vm607 = vcmp.eq.s32.totalorder %v591, 1
  %vm608 = vcmp.eq.s32.totalorder %v592, 1
  %vm609 = vcmp.eq.s32.totalorder %v593, 1
  %vm610 = vcmp.eq.s32.totalorder %v594, 1
  %vm611 = vcmp.eq.s32.totalorder %v595, 1
  %vm612 = vcmp.eq.s32.totalorder %v596, 1
  %vm613 = vcmp.eq.s32.totalorder %v597, 1
  %vm614 = vcmp.eq.s32.totalorder %v598, 1
  %vm615 = vcmp.eq.s32.totalorder %v599, 1
  %vm616 = vcmp.eq.s32.totalorder %v600, 1
  %vm617 = vcmp.eq.s32.totalorder %v601, 1
  %vm618 = vcmp.eq.s32.totalorder %v602, 1
  %vm619 = vcmp.eq.s32.totalorder %v603, 1
  %vm620 = vcmp.eq.s32.totalorder %v604, 1
  %v621 = vsel %vm588, 1, 0
  %v622 = vlaneseq
  %v623 = vshrl.u32 %v622, 7
  %v624 = vsub.s32 0, %v623
  %v625 = vrot.slane %v621, %v624
  %vm626 = vcmp.eq.s32.totalorder %v625, 1
  %vm627 = vmand %vm605, %vm626
  %vm628 = vmand %vm606, %vm626
  %vm629 = vmand %vm607, %vm626
  %vm630 = vmand %vm608, %vm626
  %vm631 = vmand %vm609, %vm626
  %vm632 = vmand %vm610, %vm626
  %vm633 = vmand %vm611, %vm626
  %vm634 = vmand %vm612, %vm626
  %vm635 = vmand %vm613, %vm626
  %vm636 = vmand %vm614, %vm626
  %vm637 = vmand %vm615, %vm626
  %vm638 = vmand %vm616, %vm626
  %vm639 = vmand %vm617, %vm626
  %vm640 = vmand %vm618, %vm626
  %vm641 = vmand %vm619, %vm626
  %vm642 = vmand %vm620, %vm626
  %v643 = vstv %s25
  %vm644 = vcmp.lt.s32.totalorder %v485, %v643
  %vm645 = vcmp.lt.s32.totalorder %v486, %v643
  %vm646 = vcmp.lt.s32.totalorder %v487, %v643
  %vm647 = vcmp.lt.s32.totalorder %v488, %v643
  %vm648 = vcmp.lt.s32.totalorder %v489, %v643
  %vm649 = vcmp.lt.s32.totalorder %v490, %v643
  %vm650 = vcmp.lt.s32.totalorder %v491, %v643
  %vm651 = vcmp.lt.s32.totalorder %v492, %v643
  %vm652 = vcmp.lt.s32.totalorder %v493, %v643
  %vm653 = vcmp.lt.s32.totalorder %v494, %v643
  %vm654 = vcmp.lt.s32.totalorder %v495, %v643
  %vm655 = vcmp.lt.s32.totalorder %v496, %v643
  %vm656 = vcmp.lt.s32.totalorder %v497, %v643
  %vm657 = vcmp.lt.s32.totalorder %v498, %v643
  %vm658 = vcmp.lt.s32.totalorder %v499, %v643
  %vm659 = vcmp.lt.s32.totalorder %v500, %v643
  %vm660 = vcmp.lt.s32.totalorder %v501, %v643
  %v661 = vsel %vm644, 1, 0
  %v662 = vsel %vm645, 1, 0
  %v663 = vsel %vm646, 1, 0
  %v664 = vsel %vm647, 1, 0
  %v665 = vsel %vm648, 1, 0
  %v666 = vsel %vm649, 1, 0
  %v667 = vsel %vm650, 1, 0
  %v668 = vsel %vm651, 1, 0
  %v669 = vsel %vm652, 1, 0
  %v670 = vsel %vm653, 1, 0
  %v671 = vsel %vm654, 1, 0
  %v672 = vsel %vm655, 1, 0
  %v673 = vsel %vm656, 1, 0
  %v674 = vsel %vm657, 1, 0
  %v675 = vsel %vm658, 1, 0
  %v676 = vsel %vm659, 1, 0
  %vm677 = vcmp.eq.s32.totalorder %v661, 1
  %vm678 = vcmp.eq.s32.totalorder %v662, 1
  %vm679 = vcmp.eq.s32.totalorder %v663, 1
  %vm680 = vcmp.eq.s32.totalorder %v664, 1
  %vm681 = vcmp.eq.s32.totalorder %v665, 1
  %vm682 = vcmp.eq.s32.totalorder %v666, 1
  %vm683 = vcmp.eq.s32.totalorder %v667, 1
  %vm684 = vcmp.eq.s32.totalorder %v668, 1
  %vm685 = vcmp.eq.s32.totalorder %v669, 1
  %vm686 = vcmp.eq.s32.totalorder %v670, 1
  %vm687 = vcmp.eq.s32.totalorder %v671, 1
  %vm688 = vcmp.eq.s32.totalorder %v672, 1
  %vm689 = vcmp.eq.s32.totalorder %v673, 1
  %vm690 = vcmp.eq.s32.totalorder %v674, 1
  %vm691 = vcmp.eq.s32.totalorder %v675, 1
  %vm692 = vcmp.eq.s32.totalorder %v676, 1
  %v693 = vsel %vm660, 1, 0
  %v694 = vlaneseq
  %v695 = vshrl.u32 %v694, 7
  %v696 = vsub.s32 0, %v695
  %v697 = vrot.slane %v693, %v696
  %vm698 = vcmp.eq.s32.totalorder %v697, 1
  %vm699 = vmor %vm677, %vm698
  %vm700 = vmor %vm678, %vm698
  %vm701 = vmor %vm679, %vm698
  %vm702 = vmor %vm680, %vm698
  %vm703 = vmor %vm681, %vm698
  %vm704 = vmor %vm682, %vm698
  %vm705 = vmor %vm683, %vm698
  %vm706 = vmor %vm684, %vm698
  %vm707 = vmor %vm685, %vm698
  %vm708 = vmor %vm686, %vm698
  %vm709 = vmor %vm687, %vm698
  %vm710 = vmor %vm688, %vm698
  %vm711 = vmor %vm689, %vm698
  %vm712 = vmor %vm690, %vm698
  %vm713 = vmor %vm691, %vm698
  %vm714 = vmor %vm692, %vm698
  %vm715 = vmand %vm627, %vm699
  %vm716 = vmand %vm628, %vm700
  %vm717 = vmand %vm629, %vm701
  %vm718 = vmand %vm630, %vm702
  %vm719 = vmand %vm631, %vm703
  %vm720 = vmand %vm632, %vm704
  %vm721 = vmand %vm633, %vm705
  %vm722 = vmand %vm634, %vm706
  %vm723 = vmand %vm635, %vm707
  %vm724 = vmand %vm636, %vm708
  %vm725 = vmand %vm637, %vm709
  %vm726 = vmand %vm638, %vm710
  %vm727 = vmand %vm639, %vm711
  %vm728 = vmand %vm640, %vm712
  %vm729 = vmand %vm641, %vm713
  %vm730 = vmand %vm642, %vm714
  %v731 = vlaneseq
  %v732 = vshrl.u32 %v731, 7
  %v733 = vsub.s32 0, %v732
  %v734 = vrot.slane %v501, %v733
  %vm735 = vcmp.ne.s32.totalorder %v485, %v734
  %vm736 = vcmp.ne.s32.totalorder %v486, %v734
  %vm737 = vcmp.ne.s32.totalorder %v487, %v734
  %vm738 = vcmp.ne.s32.totalorder %v488, %v734
  %vm739 = vcmp.ne.s32.totalorder %v489, %v734
  %vm740 = vcmp.ne.s32.totalorder %v490, %v734
  %vm741 = vcmp.ne.s32.totalorder %v491, %v734
  %vm742 = vcmp.ne.s32.totalorder %v492, %v734
  %vm743 = vcmp.ne.s32.totalorder %v493, %v734
  %vm744 = vcmp.ne.s32.totalorder %v494, %v734
  %vm745 = vcmp.ne.s32.totalorder %v495, %v734
  %vm746 = vcmp.ne.s32.totalorder %v496, %v734
  %vm747 = vcmp.ne.s32.totalorder %v497, %v734
  %vm748 = vcmp.ne.s32.totalorder %v498, %v734
  %vm749 = vcmp.ne.s32.totalorder %v499, %v734
  %vm750 = vcmp.ne.s32.totalorder %v500, %v734
  %vm751 = vmand %vm555, %vm735
  %vm752 = vmand %vm556, %vm736
  %vm753 = vmand %vm557, %vm737
  %vm754 = vmand %vm558, %vm738
  %vm755 = vmand %vm559, %vm739
  %vm756 = vmand %vm560, %vm740
  %vm757 = vmand %vm561, %vm741
  %vm758 = vmand %vm562, %vm742
  %vm759 = vmand %vm563, %vm743
  %vm760 = vmand %vm564, %vm744
  %vm761 = vmand %vm565, %vm745
  %vm762 = vmand %vm566, %vm746
  %vm763 = vmand %vm567, %vm747
  %vm764 = vmand %vm568, %vm748
  %vm765 = vmand %vm569, %vm749
  %vm766 = vmand %vm570, %vm750
  %vm767 = vmand %vm751, %vm715
  %vm768 = vmand %vm752, %vm716
  %vm769 = vmand %vm753, %vm717
  %vm770 = vmand %vm754, %vm718
  %vm771 = vmand %vm755, %vm719
  %vm772 = vmand %vm756, %vm720
  %vm773 = vmand %vm757, %vm721
  %vm774 = vmand %vm758, %vm722
  %vm775 = vmand %vm759, %vm723
  %vm776 = vmand %vm760, %vm724
  %vm777 = vmand %vm761, %vm725
  %vm778 = vmand %vm762, %vm726
  %vm779 = vmand %vm763, %vm727
  %vm780 = vmand %vm764, %vm728
  %vm781 = vmand %vm765, %vm729
  %vm782 = vmand %vm766, %vm730
  %vm783 = vmxor %vm555, 1
  %vm784 = vmxor %vm556, 1
  %vm785 = vmxor %vm557, 1
  %vm786 = vmxor %vm558, 1
  %vm787 = vmxor %vm559, 1
  %vm788 = vmxor %vm560, 1
  %vm789 = vmxor %vm561, 1
  %vm790 = vmxor %vm562, 1
  %vm791 = vmxor %vm563, 1
  %vm792 = vmxor %vm564, 1
  %vm793 = vmxor %vm565, 1
  %vm794 = vmxor %vm566, 1
  %vm795 = vmxor %vm567, 1
  %vm796 = vmxor %vm568, 1
  %vm797 = vmxor %vm569, 1
  %vm798 = vmxor %vm570, 1
  %vm799 = vmand %vm783, %vm715
  %vm800 = vmand %vm784, %vm716
  %vm801 = vmand %vm785, %vm717
  %vm802 = vmand %vm786, %vm718
  %vm803 = vmand %vm787, %vm719
  %vm804 = vmand %vm788, %vm720
  %vm805 = vmand %vm789, %vm721
  %vm806 = vmand %vm790, %vm722
  %vm807 = vmand %vm791, %vm723
  %vm808 = vmand %vm792, %vm724
  %vm809 = vmand %vm793, %vm725
  %vm810 = vmand %vm794, %vm726
  %vm811 = vmand %vm795, %vm727
  %vm812 = vmand %vm796, %vm728
  %vm813 = vmand %vm797, %vm729
  %vm814 = vmand %vm798, %vm730
  %v815 = vsel %vm767, %v361, 0.0
  %v816 = vsel %vm768, %v368, 0.0
  %v817 = vsel %vm769, %v375, 0.0
  %v818 = vsel %vm770, %v382, 0.0
  %v819 = vsel %vm771, %v389, 0.0
  %v820 = vsel %vm772, %v396, 0.0
  %v821 = vsel %vm773, %v403, 0.0
  %v822 = vsel %vm774, %v410, 0.0
  %v823 = vsel %vm775, %v417, 0.0
  %v824 = vsel %vm776, %v424, 0.0
  %v825 = vsel %vm777, %v431, 0.0
  %v826 = vsel %vm778, %v438, 0.0
  %v827 = vsel %vm779, %v445, 0.0
  %v828 = vsel %vm780, %v452, 0.0
  %v829 = vsel %vm781, %v459, 0.0
  %v830 = vsel %vm782, %v466, 0.0
  %v831 = vsub.f32 1.0, %v361
  %v832 = vsub.f32 1.0, %v368
  %v833 = vsub.f32 1.0, %v375
  %v834 = vsub.f32 1.0, %v382
  %v835 = vsub.f32 1.0, %v389
  %v836 = vsub.f32 1.0, %v396
  %v837 = vsub.f32 1.0, %v403
  %v838 = vsub.f32 1.0, %v410
  %v839 = vsub.f32 1.0, %v417
  %v840 = vsub.f32 1.0, %v424
  %v841 = vsub.f32 1.0, %v431
  %v842 = vsub.f32 1.0, %v438
  %v843 = vsub.f32 1.0, %v445
  %v844 = vsub.f32 1.0, %v452
  %v845 = vsub.f32 1.0, %v459
  %v846 = vsub.f32 1.0, %v466
  %v847 = vmax.f32 %v831, 0.0
  %v848 = vmax.f32 %v832, 0.0
  %v849 = vmax.f32 %v833, 0.0
  %v850 = vmax.f32 %v834, 0.0
  %v851 = vmax.f32 %v835, 0.0
  %v852 = vmax.f32 %v836, 0.0
  %v853 = vmax.f32 %v837, 0.0
  %v854 = vmax.f32 %v838, 0.0
  %v855 = vmax.f32 %v839, 0.0
  %v856 = vmax.f32 %v840, 0.0
  %v857 = vmax.f32 %v841, 0.0
  %v858 = vmax.f32 %v842, 0.0
  %v859 = vmax.f32 %v843, 0.0
  %v860 = vmax.f32 %v844, 0.0
  %v861 = vmax.f32 %v845, 0.0
  %v862 = vmax.f32 %v846, 0.0
  %v863 = vsel %vm799, %v847, 0.0
  %v864 = vsel %vm800, %v848, 0.0
  %v865 = vsel %vm801, %v849, 0.0
  %v866 = vsel %vm802, %v850, 0.0
  %v867 = vsel %vm803, %v851, 0.0
  %v868 = vsel %vm804, %v852, 0.0
  %v869 = vsel %vm805, %v853, 0.0
  %v870 = vsel %vm806, %v854, 0.0
  %v871 = vsel %vm807, %v855, 0.0
  %v872 = vsel %vm808, %v856, 0.0
  %v873 = vsel %vm809, %v857, 0.0
  %v874 = vsel %vm810, %v858, 0.0
  %v875 = vsel %vm811, %v859, 0.0
  %v876 = vsel %vm812, %v860, 0.0
  %v877 = vsel %vm813, %v861, 0.0
  %v878 = vsel %vm814, %v862, 0.0
  %v879 = vadd.f32 %v815, %v816
  %v880 = vadd.f32 %v879, %v817
  %v881 = vadd.f32 %v880, %v818
  %v882 = vadd.f32 %v881, %v819
  %v883 = vadd.f32 %v882, %v820
  %v884 = vadd.f32 %v883, %v821
  %v885 = vadd.f32 %v884, %v822
  %v886 = vadd.f32 %v885, %v823
  %v887 = vadd.f32 %v886, %v824
  %v888 = vadd.f32 %v887, %v825
  %v889 = vadd.f32 %v888, %v826
  %v890 = vadd.f32 %v889, %v827
  %v891 = vadd.f32 %v890, %v828
  %v892 = vadd.f32 %v891, %v829
  %v893 = vadd.f32 %v892, %v830
  %v894 = vrot.slane %v893, 4
  %v895 = vadd.f32 %v893, %v894
  %v896 = vrot.slane %v895, 2
  %v897 = vadd.f32 %v895, %v896
  %v898 = vrot.slane %v897, 1
  %v899 = vadd.f32 %v897, %v898
  %900 = vst [vmem:[%s5] sm:$0x1] %v899
  %vm901 = vcmp.gt.f32.partialorder %v815, 0.0
  %vm902 = vcmp.gt.f32.partialorder %v816, 0.0
  %vm903 = vcmp.gt.f32.partialorder %v817, 0.0
  %vm904 = vcmp.gt.f32.partialorder %v818, 0.0
  %vm905 = vcmp.gt.f32.partialorder %v819, 0.0
  %vm906 = vcmp.gt.f32.partialorder %v820, 0.0
  %vm907 = vcmp.gt.f32.partialorder %v821, 0.0
  %vm908 = vcmp.gt.f32.partialorder %v822, 0.0
  %vm909 = vcmp.gt.f32.partialorder %v823, 0.0
  %vm910 = vcmp.gt.f32.partialorder %v824, 0.0
  %vm911 = vcmp.gt.f32.partialorder %v825, 0.0
  %vm912 = vcmp.gt.f32.partialorder %v826, 0.0
  %vm913 = vcmp.gt.f32.partialorder %v827, 0.0
  %vm914 = vcmp.gt.f32.partialorder %v828, 0.0
  %vm915 = vcmp.gt.f32.partialorder %v829, 0.0
  %vm916 = vcmp.gt.f32.partialorder %v830, 0.0
  %v917 = vsel %vm901, 1, 0
  %v918 = vsel %vm902, 1, 0
  %v919 = vsel %vm903, 1, 0
  %v920 = vsel %vm904, 1, 0
  %v921 = vsel %vm905, 1, 0
  %v922 = vsel %vm906, 1, 0
  %v923 = vsel %vm907, 1, 0
  %v924 = vsel %vm908, 1, 0
  %v925 = vsel %vm909, 1, 0
  %v926 = vsel %vm910, 1, 0
  %v927 = vsel %vm911, 1, 0
  %v928 = vsel %vm912, 1, 0
  %v929 = vsel %vm913, 1, 0
  %v930 = vsel %vm914, 1, 0
  %v931 = vsel %vm915, 1, 0
  %v932 = vsel %vm916, 1, 0
  %v933 = vcvt.s32.f32 %v917
  %v934 = vcvt.s32.f32 %v918
  %v935 = vcvt.s32.f32 %v919
  %v936 = vcvt.s32.f32 %v920
  %v937 = vcvt.s32.f32 %v921
  %v938 = vcvt.s32.f32 %v922
  %v939 = vcvt.s32.f32 %v923
  %v940 = vcvt.s32.f32 %v924
  %v941 = vcvt.s32.f32 %v925
  %v942 = vcvt.s32.f32 %v926
  %v943 = vcvt.s32.f32 %v927
  %v944 = vcvt.s32.f32 %v928
  %v945 = vcvt.s32.f32 %v929
  %v946 = vcvt.s32.f32 %v930
  %v947 = vcvt.s32.f32 %v931
  %v948 = vcvt.s32.f32 %v932
  %v949 = vadd.f32 %v933, %v934
  %v950 = vadd.f32 %v949, %v935
  %v951 = vadd.f32 %v950, %v936
  %v952 = vadd.f32 %v951, %v937
  %v953 = vadd.f32 %v952, %v938
  %v954 = vadd.f32 %v953, %v939
  %v955 = vadd.f32 %v954, %v940
  %v956 = vadd.f32 %v955, %v941
  %v957 = vadd.f32 %v956, %v942
  %v958 = vadd.f32 %v957, %v943
  %v959 = vadd.f32 %v958, %v944
  %v960 = vadd.f32 %v959, %v945
  %v961 = vadd.f32 %v960, %v946
  %v962 = vadd.f32 %v961, %v947
  %v963 = vadd.f32 %v962, %v948
  %v964 = vrot.slane %v963, 4
  %v965 = vadd.f32 %v963, %v964
  %v966 = vrot.slane %v965, 2
  %v967 = vadd.f32 %v965, %v966
  %v968 = vrot.slane %v967, 1
  %v969 = vadd.f32 %v967, %v968
  %970 = vst [vmem:[%s5 + $0x1] sm:$0x1] %v969
  %v971 = vadd.f32 %v863, %v864
  %v972 = vadd.f32 %v971, %v865
  %v973 = vadd.f32 %v972, %v866
  %v974 = vadd.f32 %v973, %v867
  %v975 = vadd.f32 %v974, %v868
  %v976 = vadd.f32 %v975, %v869
  %v977 = vadd.f32 %v976, %v870
  %v978 = vadd.f32 %v977, %v871
  %v979 = vadd.f32 %v978, %v872
  %v980 = vadd.f32 %v979, %v873
  %v981 = vadd.f32 %v980, %v874
  %v982 = vadd.f32 %v981, %v875
  %v983 = vadd.f32 %v982, %v876
  %v984 = vadd.f32 %v983, %v877
  %v985 = vadd.f32 %v984, %v878
  %v986 = vrot.slane %v985, 4
  %v987 = vadd.f32 %v985, %v986
  %v988 = vrot.slane %v987, 2
  %v989 = vadd.f32 %v987, %v988
  %v990 = vrot.slane %v989, 1
  %v991 = vadd.f32 %v989, %v990
  %992 = vst [vmem:[%s5 + $0x2] sm:$0x1] %v991
  %vm993 = vcmp.gt.f32.partialorder %v863, 0.0
  %vm994 = vcmp.gt.f32.partialorder %v864, 0.0
  %vm995 = vcmp.gt.f32.partialorder %v865, 0.0
  %vm996 = vcmp.gt.f32.partialorder %v866, 0.0
  %vm997 = vcmp.gt.f32.partialorder %v867, 0.0
  %vm998 = vcmp.gt.f32.partialorder %v868, 0.0
  %vm999 = vcmp.gt.f32.partialorder %v869, 0.0
  %vm1000 = vcmp.gt.f32.partialorder %v870, 0.0
  %vm1001 = vcmp.gt.f32.partialorder %v871, 0.0
  %vm1002 = vcmp.gt.f32.partialorder %v872, 0.0
  %vm1003 = vcmp.gt.f32.partialorder %v873, 0.0
  %vm1004 = vcmp.gt.f32.partialorder %v874, 0.0
  %vm1005 = vcmp.gt.f32.partialorder %v875, 0.0
  %vm1006 = vcmp.gt.f32.partialorder %v876, 0.0
  %vm1007 = vcmp.gt.f32.partialorder %v877, 0.0
  %vm1008 = vcmp.gt.f32.partialorder %v878, 0.0
  %v1009 = vsel %vm993, 1, 0
  %v1010 = vsel %vm994, 1, 0
  %v1011 = vsel %vm995, 1, 0
  %v1012 = vsel %vm996, 1, 0
  %v1013 = vsel %vm997, 1, 0
  %v1014 = vsel %vm998, 1, 0
  %v1015 = vsel %vm999, 1, 0
  %v1016 = vsel %vm1000, 1, 0
  %v1017 = vsel %vm1001, 1, 0
  %v1018 = vsel %vm1002, 1, 0
  %v1019 = vsel %vm1003, 1, 0
  %v1020 = vsel %vm1004, 1, 0
  %v1021 = vsel %vm1005, 1, 0
  %v1022 = vsel %vm1006, 1, 0
  %v1023 = vsel %vm1007, 1, 0
  %v1024 = vsel %vm1008, 1, 0
  %v1025 = vcvt.s32.f32 %v1009
  %v1026 = vcvt.s32.f32 %v1010
  %v1027 = vcvt.s32.f32 %v1011
  %v1028 = vcvt.s32.f32 %v1012
  %v1029 = vcvt.s32.f32 %v1013
  %v1030 = vcvt.s32.f32 %v1014
  %v1031 = vcvt.s32.f32 %v1015
  %v1032 = vcvt.s32.f32 %v1016
  %v1033 = vcvt.s32.f32 %v1017
  %v1034 = vcvt.s32.f32 %v1018
  %v1035 = vcvt.s32.f32 %v1019
  %v1036 = vcvt.s32.f32 %v1020
  %v1037 = vcvt.s32.f32 %v1021
  %v1038 = vcvt.s32.f32 %v1022
  %v1039 = vcvt.s32.f32 %v1023
  %v1040 = vcvt.s32.f32 %v1024
  %v1041 = vadd.f32 %v1025, %v1026
  %v1042 = vadd.f32 %v1041, %v1027
  %v1043 = vadd.f32 %v1042, %v1028
  %v1044 = vadd.f32 %v1043, %v1029
  %v1045 = vadd.f32 %v1044, %v1030
  %v1046 = vadd.f32 %v1045, %v1031
  %v1047 = vadd.f32 %v1046, %v1032
  %v1048 = vadd.f32 %v1047, %v1033
  %v1049 = vadd.f32 %v1048, %v1034
  %v1050 = vadd.f32 %v1049, %v1035
  %v1051 = vadd.f32 %v1050, %v1036
  %v1052 = vadd.f32 %v1051, %v1037
  %v1053 = vadd.f32 %v1052, %v1038
  %v1054 = vadd.f32 %v1053, %v1039
  %v1055 = vadd.f32 %v1054, %v1040
  %v1056 = vrot.slane %v1055, 4
  %v1057 = vadd.f32 %v1055, %v1056
  %v1058 = vrot.slane %v1057, 2
  %v1059 = vadd.f32 %v1057, %v1058
  %v1060 = vrot.slane %v1059, 1
  %v1061 = vadd.f32 %v1059, %v1060
  %1062 = vst [vmem:[%s5 + $0x3] sm:$0x1] %v1061
  // Predicated region
  $region18: #{cross_batch_memory_forward.1} parent=0 // pred_check
    _
  $region19: #{cross_batch_memory_forward.1} parent=0 // pred_check_branch
    %1064 = sbr.rel (0) target = $region21
  $region20: #{cross_batch_memory_forward.1} parent=0 // pred_region
    _
  $region21: #{cross_batch_memory_forward.1} parent=0 // pred_fallthru
    _
  // Predicated region
  $region22: #{cross_batch_memory_forward.1} parent=0 // pred_check
    _
  $region23: #{cross_batch_memory_forward.1} parent=0 // pred_check_branch
    %1066 = sbr.rel (0) target = $region25
  $region24: #{cross_batch_memory_forward.1} parent=0 // pred_region
    _
  $region25: #{cross_batch_memory_forward.1} parent=0 // pred_fallthru
    _

</llo_original>
